<compile_context>
chip_gen: v6e
topology: v6e:2x2x1
jax: 0.10.0
libtpu: 0.0.40
codegen_flags: <defaults>
</compile_context>

<pallas_src>
import jax
import jax.numpy as jnp
from jax.experimental import pallas as pl
from jax.experimental.pallas import tpu as pltpu


_SUBLANE = 8
_LANE = 128
_MAX_TILE = 512                      # cap for bm / bn
_VMEM_BUDGET = 20 * 1024 * 1024      # double-buffered working-set target (bytes)
_VMEM_LIMIT = 32 * 1024 * 1024       # explicit scoped-VMEM limit (safe on v5e/v6e/v7x)


def _round_up(v, m):
    return ((v + m - 1) // m) * m


def rnn_cell_kernel(x_ref, h_ref, wx_ref, wh_ref, b_ref, o_ref):
    """One (bm, bn) output tile: ReLU(x @ Wx + h @ Wh + b)."""
    # bf16 operands for the MXU (cast on the VPU in VMEM -- no extra HBM traffic),
    # f32 accumulation; bias + ReLU epilogue stays f32 on the VPU.
    x = x_ref[...].astype(jnp.bfloat16)
    h = h_ref[...].astype(jnp.bfloat16)
    acc = jnp.dot(x, wx_ref[...], preferred_element_type=jnp.float32)
    acc = acc + jnp.dot(h, wh_ref[...], preferred_element_type=jnp.float32)
    o_ref[...] = jnp.maximum(acc + b_ref[...], 0.0).astype(o_ref.dtype)


def prepare_rnn_cell_params(w_i2h, b_i2h, w_h2o, b_h2o):
    """One-time parameter prep (hoisted out of the per-step path).

    PyTorch-style params: w_i2h (H, in), b_i2h (H,), w_h2o (H, H), b_h2o (H,).
    Returns bf16 pre-transposed weight slabs (reduction dims unpadded, output
    lane dim padded to a multiple of 128), a fused f32 bias, and static meta.
    """
    H, in_dim = w_i2h.shape
    H_pad = _round_up(H, _LANE)

    wx = jnp.asarray(w_i2h, jnp.float32).T            # (in, H)
    wh = jnp.asarray(w_h2o, jnp.float32).T            # (H,  H)
    wx = jnp.pad(wx, ((0, 0), (0, H_pad - H))).astype(jnp.bfloat16)
    wh = jnp.pad(wh, ((0, 0), (0, H_pad - H))).astype(jnp.bfloat16)

    b = (jnp.asarray(b_i2h, jnp.float32)
         + jnp.asarray(b_h2o, jnp.float32)).reshape(1, H)
    b = jnp.pad(b, ((0, 0), (0, H_pad - H)))          # (1, H_pad), f32

    meta = dict(input_dim=in_dim, hidden_dim=H, H_pad=H_pad)
    return wx, wh, b, meta


def _pick_tiles(B, in_dim, H, H_pad):
    """Choose (bm, B_pad, bn) so the double-buffered tiles fit the VMEM budget."""
    def budget(bm_, bn_):
        return 2 * (bm_ * (in_dim + H) * 4            # x + h tiles (f32)
                    + (in_dim + H) * bn_ * 2          # Wx + Wh tiles (bf16)
                    + bn_ * 4                         # bias tile
                    + bm_ * bn_ * 4)                  # out tile (f32)

    # Hidden (N / lane) tile candidates: lane-dense divisors of H_pad, biggest first.
    bn_cands = [c for c in (512, 384, 256, 128) if c <= H_pad and H_pad % c == 0]
    if H_pad <= _MAX_TILE:
        bn_cands = [H_pad] + bn_cands
    # Batch (M / sublane) tile candidates: one full-extent block when B is small
    # (no batch padding, single batch tile), otherwise 8-aligned tiles.
    bm_cands = [B] if B <= _MAX_TILE else [512, 256, 128, 64, 32, 16, 8]

    bm, bn = bm_cands[0], bn_cands[0]
    for cand in bm_cands:
        bm = cand
        if budget(bm, bn) <= _VMEM_BUDGET:
            break
    for cand in bn_cands:
        bn = cand
        if budget(bm, bn) <= _VMEM_BUDGET:
            break
    B_pad = B if bm == B else _round_up(B, bm)
    return bm, B_pad, bn


def rnn_cell_forward(x, hidden, wx, wh, b, meta, out_dtype=jnp.float32):
    """Single SRNN-cell step: ReLU(x @ W_i2h^T + h @ W_h2o^T + b_i2h + b_h2o)."""
    B = x.shape[0]
    in_dim, H, H_pad = meta["input_dim"], meta["hidden_dim"], meta["H_pad"]
    bm, B_pad, bn = _pick_tiles(B, in_dim, H, H_pad)

    x_in, h_in = x, hidden
    if B_pad != B:  # only when the batch actually needs tiling/alignment
        x_in = jnp.pad(x, ((0, B_pad - B), (0, 0)))
        h_in = jnp.pad(hidden, ((0, B_pad - B), (0, 0)))

    n_j = H_pad // bn       # hidden/weight tiles (OUTER: each weight block fetched once)
    n_i = B_pad // bm       # batch tiles         (INNER: reuses the resident weight block)

    cost = pl.CostEstimate(
        flops=2 * B_pad * (in_dim + H) * H_pad,
        transcendentals=0,
        bytes_accessed=(B_pad * (in_dim + H) * 4        # x + h
                        + (in_dim + H) * H_pad * 2      # Wx + Wh
                        + H_pad * 4                     # bias
                        + B_pad * H_pad * 4))           # out

    out = pl.pallas_call(
        rnn_cell_kernel,
        out_shape=jax.ShapeDtypeStruct((B_pad, H_pad), out_dtype),
        grid_spec=pl.GridSpec(
            grid=(n_j, n_i),                               # weights outer, batch inner
            in_specs=[
                pl.BlockSpec((bm, in_dim), lambda j, i: (i, 0)),   # x
                pl.BlockSpec((bm, H), lambda j, i: (i, 0)),        # hidden
                pl.BlockSpec((in_dim, bn), lambda j, i: (0, j)),   # Wx = W_i2h^T
                pl.BlockSpec((H, bn), lambda j, i: (0, j)),        # Wh = W_h2o^T
                pl.BlockSpec((1, bn), lambda j, i: (0, j)),        # fused bias
            ],
            out_specs=pl.BlockSpec((bm, bn), lambda j, i: (i, j)),
        ),
        compiler_params=pltpu.CompilerParams(
            dimension_semantics=("parallel", "parallel"),
            vmem_limit_bytes=_VMEM_LIMIT),
        cost_estimate=cost,
    )(x_in, h_in, wx, wh, b)

    # Strip the lane/batch alignment padding back to the logical (B, H) shape.
    if B_pad != B or H_pad != H:
        out = out[:B, :H]
    return out


if __name__ == "__main__":
    batch = 2
    input_dim = 16
    hidden_dim = 32

    key = jax.random.PRNGKey(0)
    kx, khid, kwi, kbi, kwh, kbh = jax.random.split(key, 6)

    x = jax.random.normal(kx, (batch, input_dim), dtype=jnp.float32)
    hidden = jax.random.normal(khid, (batch, hidden_dim), dtype=jnp.float32)

    # Deterministic init mimicking nn.Linear's uniform(-k, k), k = 1/sqrt(fan_in).
    ki = 1.0 / jnp.sqrt(jnp.float32(input_dim))
    kh_ = 1.0 / jnp.sqrt(jnp.float32(hidden_dim))
    w_i2h = jax.random.uniform(kwi, (hidden_dim, input_dim), jnp.float32, -ki, ki)
    b_i2h = jax.random.uniform(kbi, (hidden_dim,), jnp.float32, -ki, ki)
    w_h2o = jax.random.uniform(kwh, (hidden_dim, hidden_dim), jnp.float32, -kh_, kh_)
    b_h2o = jax.random.uniform(kbh, (hidden_dim,), jnp.float32, -kh_, kh_)

    # One-time param prep (split/transpose/pad/bf16), then a single step call.
    wx, wh, b, meta = prepare_rnn_cell_params(w_i2h, b_i2h, w_h2o, b_h2o)
    out = rnn_cell_forward(x, hidden, wx, wh, b, meta)
    out = jax.block_until_ready(out)

    # Reference with the same bf16-rounded operands (the MXU consumes bf16 and
    # accumulates in f32 on both paths).
    to_bf = lambda a: jnp.asarray(a, jnp.bfloat16).astype(jnp.float32)
    ref = jnp.maximum(
        to_bf(x) @ to_bf(w_i2h).T + b_i2h + to_bf(hidden) @ to_bf(w_h2o).T + b_h2o,
        0.0)

    assert out.shape == (batch, hidden_dim)
    assert jnp.allclose(out, ref, atol=2e-3, rtol=2e-3), "mismatch vs reference"

    print("KERNEL_OK")
</pallas_src>

<mosaic_0001>
module attributes {stable_mosaic.version = 11 : i64} {
  func.func @rnn_cell_kernel(%arg0: i32, %arg1: i32, %arg2: memref<2x16xf32, #tpu.memory_space<vmem>>, %arg3: memref<2x32xf32, #tpu.memory_space<vmem>>, %arg4: memref<16x128xbf16, #tpu.memory_space<vmem>>, %arg5: memref<32x128xbf16, #tpu.memory_space<vmem>>, %arg6: memref<1x128xf32, #tpu.memory_space<vmem>>, %arg7: memref<2x128xf32, #tpu.memory_space<vmem>>) attributes {dimension_semantics = [#tpu.dimension_semantics<parallel>, #tpu.dimension_semantics<parallel>], iteration_bounds = array<i64: 1, 1>, scalar_prefetch = 0 : i64, scratch_operands = 0 : i64, tpu.core_type = #tpu.core_type<tc>, window_params = [{transform_indices = @transform_0, window_bounds = array<i64: 2, 16>}, {transform_indices = @transform_1, window_bounds = array<i64: 2, 32>}, {transform_indices = @transform_2, window_bounds = array<i64: 16, 128>}, {transform_indices = @transform_3, window_bounds = array<i64: 32, 128>}, {transform_indices = @transform_4, window_bounds = array<i64: 1, 128>}, {transform_indices = @transform_5, window_bounds = array<i64: 2, 128>}]} {
    %c0 = arith.constant 0 : index
    %c0_0 = arith.constant 0 : index
    %0 = vector.load %arg2[%c0, %c0_0] : memref<2x16xf32, #tpu.memory_space<vmem>>, vector<2x16xf32>
    %1 = arith.truncf %0 : vector<2x16xf32> to vector<2x16xbf16>
    %c0_1 = arith.constant 0 : index
    %c0_2 = arith.constant 0 : index
    %2 = vector.load %arg3[%c0_1, %c0_2] : memref<2x32xf32, #tpu.memory_space<vmem>>, vector<2x32xf32>
    %3 = arith.truncf %2 : vector<2x32xf32> to vector<2x32xbf16>
    %c0_3 = arith.constant 0 : index
    %c0_4 = arith.constant 0 : index
    %4 = vector.load %arg4[%c0_3, %c0_4] : memref<16x128xbf16, #tpu.memory_space<vmem>>, vector<16x128xbf16>
    %cst = arith.constant dense<0.000000e+00> : vector<2x128xf32>
    %5 = tpu.matmul %1, %4, %cst {dimension_numbers = #tpu.dot_dimension_numbers<[1], [0], [0], [1], [0, 0, 1, 1], [], []>} : vector<2x16xbf16>, vector<16x128xbf16>, vector<2x128xf32> -> vector<2x128xf32>
    %c0_5 = arith.constant 0 : index
    %c0_6 = arith.constant 0 : index
    %6 = vector.load %arg5[%c0_5, %c0_6] : memref<32x128xbf16, #tpu.memory_space<vmem>>, vector<32x128xbf16>
    %cst_7 = arith.constant dense<0.000000e+00> : vector<2x128xf32>
    %7 = tpu.matmul %3, %6, %cst_7 {dimension_numbers = #tpu.dot_dimension_numbers<[1], [0], [0], [1], [0, 0, 1, 1], [], []>} : vector<2x32xbf16>, vector<32x128xbf16>, vector<2x128xf32> -> vector<2x128xf32>
    %8 = arith.addf %5, %7 : vector<2x128xf32>
    %c0_8 = arith.constant 0 : index
    %c0_9 = arith.constant 0 : index
    %9 = vector.load %arg6[%c0_8, %c0_9] : memref<1x128xf32, #tpu.memory_space<vmem>>, vector<1x128xf32>
    %10 = vector.broadcast %9 : vector<1x128xf32> to vector<2x128xf32>
    %11 = arith.addf %8, %10 : vector<2x128xf32>
    %cst_10 = arith.constant 0.000000e+00 : f32
    %12 = vector.broadcast %cst_10 : f32 to vector<2x128xf32>
    %13 = arith.maximumf %11, %12 : vector<2x128xf32>
    %c0_11 = arith.constant 0 : index
    %c0_12 = arith.constant 0 : index
    %14 = vector.load %arg7[%c0_11, %c0_12] : memref<2x128xf32, #tpu.memory_space<vmem>>, vector<2x128xf32>
    tpu.vector_store %arg7[%c0_11, %c0_12], %13 {strides = array<i32>} : memref<2x128xf32, #tpu.memory_space<vmem>>, vector<2x128xf32>,
    return
  }
  func.func @transform_0(%arg0: i32, %arg1: i32) -> (i32, i32) {
    %c0_i32 = arith.constant 0 : i32
    %c0_i32_0 = arith.constant 0 : i32
    return %arg1, %c0_i32 : i32, i32
  }
  func.func @transform_1(%arg0: i32, %arg1: i32) -> (i32, i32) {
    %c0_i32 = arith.constant 0 : i32
    %c0_i32_0 = arith.constant 0 : i32
    return %arg1, %c0_i32 : i32, i32
  }
  func.func @transform_2(%arg0: i32, %arg1: i32) -> (i32, i32) {
    %c0_i32 = arith.constant 0 : i32
    %c0_i32_0 = arith.constant 0 : i32
    return %c0_i32, %arg0 : i32, i32
  }
  func.func @transform_3(%arg0: i32, %arg1: i32) -> (i32, i32) {
    %c0_i32 = arith.constant 0 : i32
    %c0_i32_0 = arith.constant 0 : i32
    return %c0_i32, %arg0 : i32, i32
  }
  func.func @transform_4(%arg0: i32, %arg1: i32) -> (i32, i32) {
    %c0_i32 = arith.constant 0 : i32
    %c0_i32_0 = arith.constant 0 : i32
    return %c0_i32, %arg0 : i32, i32
  }
  func.func @transform_5(%arg0: i32, %arg1: i32) -> (i32, i32) {
    %c0_i32 = arith.constant 0 : i32
    return %arg1, %arg0 : i32, i32
  }
}

</mosaic_0001>

<llo_original>
// kernel: tpu_custom_call.1
$region0: #{tpu_custom_call.1}
  #allocation0 [shape = 'u32[]', space=smem, size = 0x4, offset = 0x4, fixed_abs, tag = 'smem constant byte address 0x4 - core index']
  #allocation1 [shape = 'u32[144,128]{1,0:T(1,128)}', space=vmem, size = 0x12000, scoped, tag = 'internal scratch']
  %s0 = inlined_call_operand.hbm [shape: f32[2,16], index: 0, kind: input, shape index: {}]
  %s1 = inlined_call_operand.hbm [shape: f32[2,32], index: 1, kind: input, shape index: {}]
  %s2 = inlined_call_operand.hbm [shape: bf16[16,128], index: 2, kind: input, shape index: {}]
  %s3 = inlined_call_operand.hbm [shape: bf16[32,128], index: 3, kind: input, shape index: {}]
  %s4 = inlined_call_operand.vmem [shape: f32[1,128], index: 4, kind: input, shape index: {}]
  %s5 = inlined_call_operand.hbm [shape: f32[2,128], index: 5, kind: output, shape index: {}]
  %s6 = sld [smem:[#allocation0]]
  $region46: #{tpu_custom_call.1} parent=0
    _
  %s8 = ssub.s32 1, %s6
  %s9 = scalar_select 0, %s8, %s6
  $region1: #{tpu_custom_call.1} parent=0
    #allocation2 [shape = 'u8[1024]{0}', space=vmem, size = 0x400, scoped, tag = 'input window, operand 0, single buffered']
    #allocation3 [shape = 's32[1]{0}', space=sflag, size = 0x4, scoped, tag = 'scoped memory for tpu_custom_call.1']
    #allocation4 [shape = 's32[1]{0}', space=sflag, size = 0x4, scoped, tag = 'scoped memory for tpu_custom_call.1']
    #allocation5 [shape = 'u8[1024]{0}', space=vmem, size = 0x400, scoped, tag = 'input window, operand 1, single buffered']
    #allocation6 [shape = 's32[1]{0}', space=sflag, size = 0x4, scoped, tag = 'scoped memory for tpu_custom_call.1']
    #allocation7 [shape = 'u8[4096]{0}', space=vmem, size = 0x1000, scoped, tag = 'input window, operand 2, single buffered']
    #allocation8 [shape = 'u8[8192]{0}', space=vmem, size = 0x2000, scoped, tag = 'input window, operand 3, single buffered']
    #allocation9 [shape = 's32[1]{0}', space=sflag, size = 0x4, scoped, tag = 'scoped memory for tpu_custom_call.1']
    #allocation10 [shape = 'u8[1024]{0}', space=vmem, size = 0x400, scoped, tag = 'output window, operand 0, single buffered']
    %10 = vsyncpa [#allocation3], 0
    %11 = vsyncpa [#allocation6], 0
    %12 = vsyncpa [#allocation9], 0
    %13 = vsyncpa [#allocation4], 0
    // Predicated region
    $region2: #{tpu_custom_call.1} parent=1 // pred_check
      _
    $region3: #{tpu_custom_call.1} parent=1 // pred_check_branch
      %15 = sbr.rel (0) target = $region5
    $region4: #{tpu_custom_call.1} parent=1 // pred_region
      %s17 = ssub.s32 32, 32
      %18 = vsyncadd [#allocation3], %s17
      %s20 = sshll.u32 [#allocation2], 4
      %s21 = int_to_ptr.vmem [resolvable:$true] %s20
      %23 = dma.hbm_to_vmem [thread:$0]  %s0, 32, %s21, [#allocation3]
    $region5: #{tpu_custom_call.1} parent=1 // pred_fallthru
      _
    // Predicated region
    $region6: #{tpu_custom_call.1} parent=1 // pred_check
      _
    $region7: #{tpu_custom_call.1} parent=1 // pred_check_branch
      %25 = sbr.rel (0) target = $region9
    $region8: #{tpu_custom_call.1} parent=1 // pred_region
      %s27 = ssub.s32 32, 32
      %28 = vsyncadd [#allocation6], %s27
      %s30 = sshll.u32 [#allocation5], 4
      %s31 = int_to_ptr.vmem [resolvable:$true] %s30
      %33 = dma.hbm_to_vmem [thread:$0]  %s1, 32, %s31, [#allocation6]
    $region9: #{tpu_custom_call.1} parent=1 // pred_fallthru
      _
    // Predicated region
    $region10: #{tpu_custom_call.1} parent=1 // pred_check
      _
    $region11: #{tpu_custom_call.1} parent=1 // pred_check_branch
      %35 = sbr.rel (0) target = $region13
    $region12: #{tpu_custom_call.1} parent=1 // pred_region
      %s37 = ssub.s32 128, 128
      %38 = vsyncadd [#allocation6], %s37
      %s39 = sshll.u32 [#allocation7], 4
      %s40 = int_to_ptr.vmem [resolvable:$true] %s39
      %45 = dma.hbm_to_vmem [thread:$0]  %s2, 128, %s40, [#allocation6], 64, 64, 4
    $region13: #{tpu_custom_call.1} parent=1 // pred_fallthru
      _
    // Predicated region
    $region14: #{tpu_custom_call.1} parent=1 // pred_check
      _
    $region15: #{tpu_custom_call.1} parent=1 // pred_check_branch
      %47 = sbr.rel (0) target = $region17
    $region16: #{tpu_custom_call.1} parent=1 // pred_region
      %s49 = ssub.s32 256, 256
      %50 = vsyncadd [#allocation9], %s49
      %s51 = sshll.u32 [#allocation8], 4
      %s52 = int_to_ptr.vmem [resolvable:$true] %s51
      %57 = dma.hbm_to_vmem [thread:$0]  %s3, 256, %s52, [#allocation9], 64, 64, 4
    $region17: #{tpu_custom_call.1} parent=1 // pred_fallthru
      _
    // Predicated region
    $region18: #{tpu_custom_call.1} parent=1 // pred_check
      _
    $region19: #{tpu_custom_call.1} parent=1 // pred_check_branch
      %59 = sbr.rel (0) target = $region21
    $region20: #{tpu_custom_call.1} parent=1 // pred_region
      _
    $region21: #{tpu_custom_call.1} parent=1 // pred_fallthru
      _
    // Predicated region
    $region22: #{tpu_custom_call.1} parent=1 // pred_check
      _
    $region23: #{tpu_custom_call.1} parent=1 // pred_check_branch
      %61 = sbr.rel (0) target = $region25
    $region24: #{tpu_custom_call.1} parent=1 // pred_region
      %62 = dma.done [#allocation3], 32
    $region25: #{tpu_custom_call.1} parent=1 // pred_fallthru
      _
    // Predicated region
    $region26: #{tpu_custom_call.1} parent=1 // pred_check
      _
    $region27: #{tpu_custom_call.1} parent=1 // pred_check_branch
      %64 = sbr.rel (0) target = $region29
    $region28: #{tpu_custom_call.1} parent=1 // pred_region
      %65 = dma.done [#allocation6], 32
    $region29: #{tpu_custom_call.1} parent=1 // pred_fallthru
      _
    // Predicated region
    $region30: #{tpu_custom_call.1} parent=1 // pred_check
      _
    $region31: #{tpu_custom_call.1} parent=1 // pred_check_branch
      %67 = sbr.rel (0) target = $region33
    $region32: #{tpu_custom_call.1} parent=1 // pred_region
      %68 = dma.done [#allocation6], 128
    $region33: #{tpu_custom_call.1} parent=1 // pred_fallthru
      _
    // Predicated region
    $region34: #{tpu_custom_call.1} parent=1 // pred_check
      _
    $region35: #{tpu_custom_call.1} parent=1 // pred_check_branch
      %70 = sbr.rel (0) target = $region37
    $region36: #{tpu_custom_call.1} parent=1 // pred_region
      %71 = dma.done [#allocation9], 256
    $region37: #{tpu_custom_call.1} parent=1 // pred_fallthru
      _
    %v73 = vld [vmem:[#allocation2] sm:$0x3]
    %v74 = vpack.c.bf16 %v73, %v73
    %v75 = vld [vmem:[#allocation5] sm:$0x3]
    %v76 = vpack.c.bf16 %v75, %v75
    %v77 = vld [vmem:[#allocation7] sm:$0xf]
    %v78 = vld [vmem:[#allocation7 + $0x4] sm:$0xf]
    %v79 = vld [vmem:[#allocation8] sm:$0xf]
    %v80 = vld [vmem:[#allocation8 + $0x4] sm:$0xf]
    %v81 = vld [vmem:[#allocation8 + $0x8] sm:$0xf]
    %v82 = vld [vmem:[#allocation8 + $0xc] sm:$0xf]
    %v87 = vunpack.c.l.b16 %v79
    %v88 = vunpack.c.l.b16 %v80
    %v89 = vunpack.c.l.b16 %v81
    %v90 = vunpack.c.l.b16 %v82
    %v91 = vpack.c.b16 %v88, %v87
    %v92 = vpack.c.b16 %v90, %v89
    %vm95 = vcmask 261120
    %v97 = vsel %vm95, %v76, 0
    %99 = vmatprep.subr.bf16.mxu0 0
    %100 = vmatpush1.bf16.msra.mxu0 0
    %101 = vmatprep.subr.bf16.mxu0 0
    %102 = vmatpush1.bf16.msra.mxu0 0
    %103 = vmatprep.subr.bf16.mxu0 0
    %104 = vmatpush1.bf16.msra.mxu0 0
    %105 = vmatprep.subr.bf16.mxu0 0
    %106 = vmatpush1.bf16.msra.mxu0 0
    %107 = vmatprep.subr.bf16.mxu0 0
    %108 = vmatpush1.bf16.msra.mxu0 0
    %109 = vmatprep.subr.bf16.mxu0 0
    %110 = vmatpush1.bf16.msra.mxu0 0
    %111 = vmatprep.subr.bf16.mxu0 0
    %112 = vmatpush1.bf16.msra.mxu0 %v92
    %113 = vmatprep.subr.bf16.mxu0 0
    %114 = vmatpush1.bf16.msra.mxu0 %v91
    %115 = vmatprep.subr.bf16.mxu0 0
    %116 = vmatpush2.bf16.msra.mxu0 0
    %117 = vmatprep.subr.bf16.mxu0 0
    %118 = vmatpush2.bf16.msra.mxu0 0
    %119 = vmatprep.subr.bf16.mxu0 0
    %120 = vmatpush2.bf16.msra.mxu0 0
    %121 = vmatprep.subr.bf16.mxu0 0
    %122 = vmatpush2.bf16.msra.mxu0 0
    %123 = vmatprep.subr.bf16.mxu0 0
    %124 = vmatpush2.bf16.msra.mxu0 0
    %125 = vmatprep.subr.bf16.mxu0 0
    %126 = vmatpush2.bf16.msra.mxu0 0
    %127 = vmatprep.subr.bf16.mxu0 0
    %128 = vmatpush2.bf16.msra.mxu0 0
    %129 = vmatprep.subr.bf16.mxu0 0
    %130 = vmatpush2.bf16.msra.mxu0 0
    %131 = vmatprep.mubr.bf16.mxu0 0
    %132 = vmatmul.mubr.bf16.gmra.mxu0 %v97
    %v133 = vpop.f32.mrf.mxu0
    %v134 = vadd.f32 0.0, %v133
    %v135 = vpop.f32.mrf.mxu0
    %v136 = vpop.f32.mrf.mxu0
    %v137 = vpop.f32.mrf.mxu0
    %138 = vdwg.mxu0
    %v141 = vunpack.c.l.b16 %v77
    %v142 = vunpack.c.l.b16 %v78
    %v143 = vpack.c.b16 %v142, %v141
    %vm145 = vcmask 130048
    %v147 = vsel %vm145, %v74, 0
    %149 = vmatprep.subr.bf16.mxu0 0
    %150 = vmatpush1.bf16.msra.mxu0 0
    %151 = vmatprep.subr.bf16.mxu0 0
    %152 = vmatpush1.bf16.msra.mxu0 0
    %153 = vmatprep.subr.bf16.mxu0 0
    %154 = vmatpush1.bf16.msra.mxu0 0
    %155 = vmatprep.subr.bf16.mxu0 0
    %156 = vmatpush1.bf16.msra.mxu0 0
    %157 = vmatprep.subr.bf16.mxu0 0
    %158 = vmatpush1.bf16.msra.mxu0 0
    %159 = vmatprep.subr.bf16.mxu0 0
    %160 = vmatpush1.bf16.msra.mxu0 0
    %161 = vmatprep.subr.bf16.mxu0 0
    %162 = vmatpush1.bf16.msra.mxu0 0
    %163 = vmatprep.subr.bf16.mxu0 0
    %164 = vmatpush1.bf16.msra.mxu0 %v143
    %165 = vmatprep.subr.bf16.mxu0 0
    %166 = vmatpush2.bf16.msra.mxu0 0
    %167 = vmatprep.subr.bf16.mxu0 0
    %168 = vmatpush2.bf16.msra.mxu0 0
    %169 = vmatprep.subr.bf16.mxu0 0
    %170 = vmatpush2.bf16.msra.mxu0 0
    %171 = vmatprep.subr.bf16.mxu0 0
    %172 = vmatpush2.bf16.msra.mxu0 0
    %173 = vmatprep.subr.bf16.mxu0 0
    %174 = vmatpush2.bf16.msra.mxu0 0
    %175 = vmatprep.subr.bf16.mxu0 0
    %176 = vmatpush2.bf16.msra.mxu0 0
    %177 = vmatprep.subr.bf16.mxu0 0
    %178 = vmatpush2.bf16.msra.mxu0 0
    %179 = vmatprep.subr.bf16.mxu0 0
    %180 = vmatpush2.bf16.msra.mxu0 0
    %181 = vmatprep.mubr.bf16.mxu0 0
    %182 = vmatmul.mubr.bf16.gmra.mxu0 %v147
    %v183 = vpop.f32.mrf.mxu0
    %v184 = vadd.f32 %v134, %v183
    %v185 = vpop.f32.mrf.mxu0
    %v186 = vpop.f32.mrf.mxu0
    %v187 = vpop.f32.mrf.mxu0
    %188 = vdwg.mxu0
    %v189 = vld [vmem:[%s4] sm:$0x1]
    %v191 = vlaneseq
    %v192 = vshrl.u32 %v191, 7
    %v193 = vsub.s32 0, %v192
    %v194 = vrot.slane %v189, %v193
    %v196 = vadd.f32 %v184, %v194
    %v197 = vmax.f32 %v196, 0.0
    %198 = vst [vmem:[#allocation10] sm:$0x3] %v197
    // Predicated region
    $region38: #{tpu_custom_call.1} parent=1 // pred_check
      _
    $region39: #{tpu_custom_call.1} parent=1 // pred_check_branch
      %200 = sbr.rel (0) target = $region41
    $region40: #{tpu_custom_call.1} parent=1 // pred_region
      %s202 = ssub.s32 32, 32
      %203 = vsyncadd [#allocation4], %s202
      %s205 = sshll.u32 [#allocation10], 4
      %s206 = int_to_ptr.vmem [resolvable:$true] %s205
      %208 = dma.vmem_to_hbm [thread:$0]  %s206, 32, %s5, [#allocation4]
    $region41: #{tpu_custom_call.1} parent=1 // pred_fallthru
      _
    // Predicated region
    $region42: #{tpu_custom_call.1} parent=1 // pred_check
      _
    $region43: #{tpu_custom_call.1} parent=1 // pred_check_branch
      %210 = sbr.rel (0) target = $region45
    $region44: #{tpu_custom_call.1} parent=1 // pred_region
      %211 = dma.done [#allocation4], 32
    $region45: #{tpu_custom_call.1} parent=1 // pred_fallthru
      _
    %212 = vsyncpa [#allocation3], 1
    %213 = vsyncpa [#allocation6], 1
    %214 = vsyncpa [#allocation9], 1
    %215 = vsyncpa [#allocation4], 1

</llo_original>
